<compile_context>
chip_gen: v6e
topology: v6e:2x2x1
jax: 0.10.0
libtpu: 0.0.40
codegen_flags: <defaults>
</compile_context>

<pallas_src>
import jax
import jax.numpy as jnp
from jax.experimental import pallas as pl
from jax.experimental.pallas import tpu as pltpu

HIDDEN_SIZES = [128, 512, 128]
INPUT_SIZE = 28 * 28
LANE = 128


def _round_up(x, m):
    return (x + m - 1) // m * m


def _device_kind():
    try:
        return jax.devices()[0].device_kind.lower()
    except Exception:
        return ""


def _select_tile_m(batch):
    """Pick the batch tile: big enough to amortize per-grid-step overhead,
    small enough to (a) waste little padding and (b) leave >=2 tiles on the
    two-TensorCore v7x."""
    kind = _device_kind()
    candidates = (512, 256, 128) if "v5" in kind else (1024, 512, 256, 128)
    b8 = _round_up(max(batch, 1), 8)
    if b8 <= candidates[-1]:
        return b8  # tiny batch: one exact (8-aligned) tile
    cap = b8
    if "v7" in kind and b8 >= 2 * candidates[-1]:
        # Keep at least two grid tiles so both TensorCores get work.
        cap = min(cap, _round_up(-(-b8 // 2), 8))
    best_t, best_waste = None, None
    for t in candidates:
        if t > cap:
            continue
        waste = _round_up(batch, t) - batch
        if best_waste is None or waste < best_waste:
            best_t, best_waste = t, waste
    if best_t is None:
        best_t = min(cap, candidates[-1])
    return best_t


def _mlp_kernel(x_ref,
                w1_ref, b1_ref,
                w2_ref, b2_ref,
                w3_ref, b3_ref,
                w4_ref, b4_ref,
                o_ref):
    # Layer 1: Linear(784 -> 128) + ReLU.  x already bf16; f32 accumulate.
    h = jnp.dot(x_ref[...], w1_ref[...],
                preferred_element_type=jnp.float32) + b1_ref[...]
    h = jnp.maximum(h, 0.0)

    # Layer 2: Linear(128 -> 512) + ReLU
    h = jnp.dot(h.astype(jnp.bfloat16), w2_ref[...],
                preferred_element_type=jnp.float32) + b2_ref[...]
    h = jnp.maximum(h, 0.0)

    # Layer 3: Linear(512 -> 128) + ReLU
    h = jnp.dot(h.astype(jnp.bfloat16), w3_ref[...],
                preferred_element_type=jnp.float32) + b3_ref[...]
    h = jnp.maximum(h, 0.0)

    # Output layer: Linear(128 -> 128 padded). output_scale already folded in.
    out = jnp.dot(h.astype(jnp.bfloat16), w4_ref[...],
                  preferred_element_type=jnp.float32) + b4_ref[...]
    o_ref[...] = out.astype(o_ref.dtype)


def init_params(key, num_classes, input_size=INPUT_SIZE, hidden_sizes=HIDDEN_SIZES):
    """PyTorch-style (uniform +-1/sqrt(fan_in)) init, f32.

    Weights stored as (in_features, out_features); biases as (1, out_features).
    """
    dims = [input_size] + list(hidden_sizes) + [num_classes]
    params = []
    for i in range(len(dims) - 1):
        fan_in, fan_out = dims[i], dims[i + 1]
        key, kw, kb = jax.random.split(key, 3)
        bound = 1.0 / (fan_in ** 0.5)
        w = jax.random.uniform(kw, (fan_in, fan_out), jnp.float32, -bound, bound)
        b = jax.random.uniform(kb, (1, fan_out), jnp.float32, -bound, bound)
        params.append((w, b))
    return params


def prepare_params(params, num_classes, output_scale=1.0):
    """One-time transform of f32 params into kernel layout:
       - weights cast to bf16 (HBM traffic, not FLOPs, is the bottleneck)
       - last layer zero-padded to a lane-dense 128-wide output slab
       - output_scale folded into the last layer's weights/bias."""
    (w1, b1), (w2, b2), (w3, b3), (w4, b4) = params
    n_pad = max(LANE, _round_up(num_classes, LANE))
    w4s = w4 * output_scale
    b4s = b4 * output_scale
    w4p = jnp.zeros((w4.shape[0], n_pad), jnp.float32).at[:, :num_classes].set(w4s)
    b4p = jnp.zeros((1, n_pad), jnp.float32).at[:, :num_classes].set(b4s)
    return (
        (w1.astype(jnp.bfloat16), b1.astype(jnp.float32)),
        (w2.astype(jnp.bfloat16), b2.astype(jnp.float32)),
        (w3.astype(jnp.bfloat16), b3.astype(jnp.float32)),
        (w4p.astype(jnp.bfloat16), b4p.astype(jnp.float32)),
    )


def mlp_forward(x, prepped_params, num_classes, *, tile_m=None):
    """x: (B, C, H, W) or (B, input_size), ideally already bf16 (convert at
    the producer).  Returns (B, num_classes) f32 logits."""
    B = x.shape[0]
    x2d = x.reshape(B, -1)
    if x2d.dtype != jnp.bfloat16:
        # Prefer doing this at the producer; kept here only as a fallback.
        x2d = x2d.astype(jnp.bfloat16)
    in_dim = x2d.shape[1]

    (w1, b1), (w2, b2), (w3, b3), (w4, b4) = prepped_params
    n_pad = w4.shape[1]

    if tile_m is None:
        tile_m = _select_tile_m(B)
    tile_m = min(tile_m, _round_up(B, 8))
    b_pad = _round_up(B, tile_m)
    if b_pad != B:
        x2d = jnp.pad(x2d, ((0, b_pad - B), (0, 0)))
    n_tiles = pl.cdiv(b_pad, tile_m)

    flat_args = (x2d, w1, b1, w2, b2, w3, b3, w4, b4)

    def resident(a):
        # Same block index at every grid step -> Pallas keeps it VMEM-resident.
        return pl.BlockSpec(a.shape, lambda i: (0, 0))

    in_specs = [pl.BlockSpec((tile_m, in_dim), lambda i: (i, 0))]
    in_specs += [resident(a) for a in flat_args[1:]]

    out = pl.pallas_call(
        _mlp_kernel,
        out_shape=jax.ShapeDtypeStruct((b_pad, n_pad), jnp.float32),
        grid=(n_tiles,),
        in_specs=in_specs,
        out_specs=pl.BlockSpec((tile_m, n_pad), lambda i: (i, 0)),
        compiler_params=pltpu.CompilerParams(
            dimension_semantics=("parallel",)),
    )(*flat_args)

    return out[:B, :num_classes]


if __name__ == "__main__":
    key = jax.random.PRNGKey(0)
    k_x, k_p = jax.random.split(key)

    num_classes = 10
    batch = 8
    output_scale = 2.0

    # MNIST-style NCHW input (B, 1, 28, 28); f32 at generation, converted to
    # bf16 "at the producer" before it is handed to the kernel wrapper.
    x_f32 = jax.random.normal(k_x, (batch, 1, 28, 28), dtype=jnp.float32)
    x = x_f32.astype(jnp.bfloat16)

    params = init_params(k_p, num_classes)
    prepped = prepare_params(params, num_classes, output_scale=output_scale)

    out = mlp_forward(x, prepped, num_classes)
    out = jax.block_until_ready(out)
    assert out.shape == (batch, num_classes)

    # Reference 1: same bf16 inputs/weights + folded scale (validates kernel).
    def ref_bf16(x, prepped, num_classes):
        h = x.reshape(x.shape[0], -1).astype(jnp.bfloat16)
        for i, (w, b) in enumerate(prepped):
            h = jnp.dot(h.astype(jnp.bfloat16), w,
                        preferred_element_type=jnp.float32) + b
            if i < len(prepped) - 1:
                h = jnp.maximum(h, 0.0)
        return h[:, :num_classes]

    ref_out = ref_bf16(x, prepped, num_classes)
    assert jnp.allclose(out, ref_out, atol=1e-2, rtol=1e-2)

    # Reference 2: pure-f32 PyTorch semantics (looser: bf16 ~1e-2 relative).
    def ref_f32(x, params, scale):
        h = x.reshape(x.shape[0], -1)
        for i, (w, b) in enumerate(params):
            h = h @ w + b
            if i < len(params) - 1:
                h = jnp.maximum(h, 0.0)
        return h * scale

    ref32 = ref_f32(x_f32, params, output_scale)
    assert jnp.allclose(out, ref32, atol=0.25, rtol=0.1)

    print("KERNEL_OK")
</pallas_src>

<mosaic_0001>
module attributes {stable_mosaic.version = 11 : i64} {
  func.func @_mlp_kernel(%arg0: i32, %arg1: memref<8x784xbf16, #tpu.memory_space<vmem>>, %arg2: memref<784x128xbf16, #tpu.memory_space<vmem>>, %arg3: memref<1x128xf32, #tpu.memory_space<vmem>>, %arg4: memref<128x512xbf16, #tpu.memory_space<vmem>>, %arg5: memref<1x512xf32, #tpu.memory_space<vmem>>, %arg6: memref<512x128xbf16, #tpu.memory_space<vmem>>, %arg7: memref<1x128xf32, #tpu.memory_space<vmem>>, %arg8: memref<128x128xbf16, #tpu.memory_space<vmem>>, %arg9: memref<1x128xf32, #tpu.memory_space<vmem>>, %arg10: memref<8x128xf32, #tpu.memory_space<vmem>>) attributes {dimension_semantics = [#tpu.dimension_semantics<parallel>], iteration_bounds = array<i64: 1>, scalar_prefetch = 0 : i64, scratch_operands = 0 : i64, tpu.core_type = #tpu.core_type<tc>, window_params = [{transform_indices = @transform_0, window_bounds = array<i64: 8, 784>}, {pipeline_mode = #tpu.pipeline_mode<synchronous>, transform_indices = @transform_1, window_bounds = array<i64: 784, 128>}, {pipeline_mode = #tpu.pipeline_mode<synchronous>, transform_indices = @transform_2, window_bounds = array<i64: 1, 128>}, {pipeline_mode = #tpu.pipeline_mode<synchronous>, transform_indices = @transform_3, window_bounds = array<i64: 128, 512>}, {pipeline_mode = #tpu.pipeline_mode<synchronous>, transform_indices = @transform_4, window_bounds = array<i64: 1, 512>}, {pipeline_mode = #tpu.pipeline_mode<synchronous>, transform_indices = @transform_5, window_bounds = array<i64: 512, 128>}, {pipeline_mode = #tpu.pipeline_mode<synchronous>, transform_indices = @transform_6, window_bounds = array<i64: 1, 128>}, {pipeline_mode = #tpu.pipeline_mode<synchronous>, transform_indices = @transform_7, window_bounds = array<i64: 128, 128>}, {pipeline_mode = #tpu.pipeline_mode<synchronous>, transform_indices = @transform_8, window_bounds = array<i64: 1, 128>}, {transform_indices = @transform_9, window_bounds = array<i64: 8, 128>}]} {
    %c0 = arith.constant 0 : index
    %c0_0 = arith.constant 0 : index
    %0 = vector.load %arg1[%c0, %c0_0] : memref<8x784xbf16, #tpu.memory_space<vmem>>, vector<8x784xbf16>
    %c0_1 = arith.constant 0 : index
    %c0_2 = arith.constant 0 : index
    %1 = vector.load %arg2[%c0_1, %c0_2] : memref<784x128xbf16, #tpu.memory_space<vmem>>, vector<784x128xbf16>
    %cst = arith.constant dense<0.000000e+00> : vector<8x128xf32>
    %2 = tpu.matmul %0, %1, %cst {dimension_numbers = #tpu.dot_dimension_numbers<[1], [0], [0], [1], [0, 0, 1, 1], [], []>} : vector<8x784xbf16>, vector<784x128xbf16>, vector<8x128xf32> -> vector<8x128xf32>
    %c0_3 = arith.constant 0 : index
    %c0_4 = arith.constant 0 : index
    %3 = vector.load %arg3[%c0_3, %c0_4] : memref<1x128xf32, #tpu.memory_space<vmem>>, vector<1x128xf32>
    %4 = vector.broadcast %3 : vector<1x128xf32> to vector<8x128xf32>
    %5 = arith.addf %2, %4 : vector<8x128xf32>
    %cst_5 = arith.constant 0.000000e+00 : f32
    %6 = vector.broadcast %cst_5 : f32 to vector<8x128xf32>
    %7 = arith.maximumf %5, %6 : vector<8x128xf32>
    %8 = arith.truncf %7 : vector<8x128xf32> to vector<8x128xbf16>
    %c0_6 = arith.constant 0 : index
    %c0_7 = arith.constant 0 : index
    %9 = vector.load %arg4[%c0_6, %c0_7] : memref<128x512xbf16, #tpu.memory_space<vmem>>, vector<128x512xbf16>
    %cst_8 = arith.constant dense<0.000000e+00> : vector<8x512xf32>
    %10 = tpu.matmul %8, %9, %cst_8 {dimension_numbers = #tpu.dot_dimension_numbers<[1], [0], [0], [1], [0, 0, 1, 1], [], []>} : vector<8x128xbf16>, vector<128x512xbf16>, vector<8x512xf32> -> vector<8x512xf32>
    %c0_9 = arith.constant 0 : index
    %c0_10 = arith.constant 0 : index
    %11 = vector.load %arg5[%c0_9, %c0_10] : memref<1x512xf32, #tpu.memory_space<vmem>>, vector<1x512xf32>
    %12 = vector.broadcast %11 : vector<1x512xf32> to vector<8x512xf32>
    %13 = arith.addf %10, %12 : vector<8x512xf32>
    %cst_11 = arith.constant 0.000000e+00 : f32
    %14 = vector.broadcast %cst_11 : f32 to vector<8x512xf32>
    %15 = arith.maximumf %13, %14 : vector<8x512xf32>
    %16 = arith.truncf %15 : vector<8x512xf32> to vector<8x512xbf16>
    %c0_12 = arith.constant 0 : index
    %c0_13 = arith.constant 0 : index
    %17 = vector.load %arg6[%c0_12, %c0_13] : memref<512x128xbf16, #tpu.memory_space<vmem>>, vector<512x128xbf16>
    %cst_14 = arith.constant dense<0.000000e+00> : vector<8x128xf32>
    %18 = tpu.matmul %16, %17, %cst_14 {dimension_numbers = #tpu.dot_dimension_numbers<[1], [0], [0], [1], [0, 0, 1, 1], [], []>} : vector<8x512xbf16>, vector<512x128xbf16>, vector<8x128xf32> -> vector<8x128xf32>
    %c0_15 = arith.constant 0 : index
    %c0_16 = arith.constant 0 : index
    %19 = vector.load %arg7[%c0_15, %c0_16] : memref<1x128xf32, #tpu.memory_space<vmem>>, vector<1x128xf32>
    %20 = vector.broadcast %19 : vector<1x128xf32> to vector<8x128xf32>
    %21 = arith.addf %18, %20 : vector<8x128xf32>
    %cst_17 = arith.constant 0.000000e+00 : f32
    %22 = vector.broadcast %cst_17 : f32 to vector<8x128xf32>
    %23 = arith.maximumf %21, %22 : vector<8x128xf32>
    %24 = arith.truncf %23 : vector<8x128xf32> to vector<8x128xbf16>
    %c0_18 = arith.constant 0 : index
    %c0_19 = arith.constant 0 : index
    %25 = vector.load %arg8[%c0_18, %c0_19] : memref<128x128xbf16, #tpu.memory_space<vmem>>, vector<128x128xbf16>
    %cst_20 = arith.constant dense<0.000000e+00> : vector<8x128xf32>
    %26 = tpu.matmul %24, %25, %cst_20 {dimension_numbers = #tpu.dot_dimension_numbers<[1], [0], [0], [1], [0, 0, 1, 1], [], []>} : vector<8x128xbf16>, vector<128x128xbf16>, vector<8x128xf32> -> vector<8x128xf32>
    %c0_21 = arith.constant 0 : index
    %c0_22 = arith.constant 0 : index
    %27 = vector.load %arg9[%c0_21, %c0_22] : memref<1x128xf32, #tpu.memory_space<vmem>>, vector<1x128xf32>
    %28 = vector.broadcast %27 : vector<1x128xf32> to vector<8x128xf32>
    %29 = arith.addf %26, %28 : vector<8x128xf32>
    %c0_23 = arith.constant 0 : index
    %c0_24 = arith.constant 0 : index
    %30 = vector.load %arg10[%c0_23, %c0_24] : memref<8x128xf32, #tpu.memory_space<vmem>>, vector<8x128xf32>
    tpu.vector_store %arg10[%c0_23, %c0_24], %29 {strides = array<i32>} : memref<8x128xf32, #tpu.memory_space<vmem>>, vector<8x128xf32>,
    return
  }
  func.func @transform_0(%arg0: i32) -> (i32, i32) {
    %c0_i32 = arith.constant 0 : i32
    %c0_i32_0 = arith.constant 0 : i32
    return %arg0, %c0_i32 : i32, i32
  }
  func.func @transform_1(%arg0: i32) -> (i32, i32) {
    %c0_i32 = arith.constant 0 : i32
    %c0_i32_0 = arith.constant 0 : i32
    %c0_i32_1 = arith.constant 0 : i32
    return %c0_i32, %c0_i32_0 : i32, i32
  }
  func.func @transform_2(%arg0: i32) -> (i32, i32) {
    %c0_i32 = arith.constant 0 : i32
    %c0_i32_0 = arith.constant 0 : i32
    %c0_i32_1 = arith.constant 0 : i32
    return %c0_i32, %c0_i32_0 : i32, i32
  }
  func.func @transform_3(%arg0: i32) -> (i32, i32) {
    %c0_i32 = arith.constant 0 : i32
    %c0_i32_0 = arith.constant 0 : i32
    %c0_i32_1 = arith.constant 0 : i32
    return %c0_i32, %c0_i32_0 : i32, i32
  }
  func.func @transform_4(%arg0: i32) -> (i32, i32) {
    %c0_i32 = arith.constant 0 : i32
    %c0_i32_0 = arith.constant 0 : i32
    %c0_i32_1 = arith.constant 0 : i32
    return %c0_i32, %c0_i32_0 : i32, i32
  }
  func.func @transform_5(%arg0: i32) -> (i32, i32) {
    %c0_i32 = arith.constant 0 : i32
    %c0_i32_0 = arith.constant 0 : i32
    %c0_i32_1 = arith.constant 0 : i32
    return %c0_i32, %c0_i32_0 : i32, i32
  }
  func.func @transform_6(%arg0: i32) -> (i32, i32) {
    %c0_i32 = arith.constant 0 : i32
    %c0_i32_0 = arith.constant 0 : i32
    %c0_i32_1 = arith.constant 0 : i32
    return %c0_i32, %c0_i32_0 : i32, i32
  }
  func.func @transform_7(%arg0: i32) -> (i32, i32) {
    %c0_i32 = arith.constant 0 : i32
    %c0_i32_0 = arith.constant 0 : i32
    %c0_i32_1 = arith.constant 0 : i32
    return %c0_i32, %c0_i32_0 : i32, i32
  }
  func.func @transform_8(%arg0: i32) -> (i32, i32) {
    %c0_i32 = arith.constant 0 : i32
    %c0_i32_0 = arith.constant 0 : i32
    %c0_i32_1 = arith.constant 0 : i32
    return %c0_i32, %c0_i32_0 : i32, i32
  }
  func.func @transform_9(%arg0: i32) -> (i32, i32) {
    %c0_i32 = arith.constant 0 : i32
    %c0_i32_0 = arith.constant 0 : i32
    return %arg0, %c0_i32 : i32, i32
  }
}

</mosaic_0001>

<llo_original>
// kernel: tpu_custom_call.1
$region0: #{tpu_custom_call.1}
  #allocation0 [shape = 'u32[]', space=smem, size = 0x4, offset = 0x4, fixed_abs, tag = 'smem constant byte address 0x4 - core index']
  #allocation1 [shape = 'u32[144,128]{1,0:T(1,128)}', space=vmem, size = 0x12000, scoped, tag = 'internal scratch']
  %s0 = inlined_call_operand.hbm [shape: bf16[8,784], index: 0, kind: input, shape index: {}]
  %s1 = inlined_call_operand.hbm [shape: bf16[784,128], index: 1, kind: input, shape index: {}]
  %s2 = inlined_call_operand.vmem [shape: f32[1,128], index: 2, kind: input, shape index: {}]
  %s3 = inlined_call_operand.hbm [shape: bf16[128,512], index: 3, kind: input, shape index: {}]
  %s4 = inlined_call_operand.vmem [shape: f32[1,512], index: 4, kind: input, shape index: {}]
  %s5 = inlined_call_operand.hbm [shape: bf16[512,128], index: 5, kind: input, shape index: {}]
  %s6 = inlined_call_operand.vmem [shape: f32[1,128], index: 6, kind: input, shape index: {}]
  %s7 = inlined_call_operand.hbm [shape: bf16[128,128], index: 7, kind: input, shape index: {}]
  %s8 = inlined_call_operand.vmem [shape: f32[1,128], index: 8, kind: input, shape index: {}]
  %s9 = inlined_call_operand.hbm [shape: f32[8,128], index: 9, kind: output, shape index: {}]
  %s10 = sld [smem:[#allocation0]]
  $region66: #{tpu_custom_call.1} parent=0
    _
  %s12 = ssub.s32 1, %s10
  %s13 = scalar_select 0, %s12, %s10
  $region1: #{tpu_custom_call.1} parent=0
    #allocation2 [shape = 'u8[14336]{0}', space=vmem, size = 0x3800, scoped, tag = 'input window, operand 0, single buffered']
    #allocation3 [shape = 's32[1]{0}', space=sflag, size = 0x4, scoped, tag = 'scoped memory for tpu_custom_call.1']
    #allocation4 [shape = 's32[1]{0}', space=sflag, size = 0x4, scoped, tag = 'scoped memory for tpu_custom_call.1']
    #allocation5 [shape = 'u8[200704]{0}', space=vmem, size = 0x31000, scoped, tag = 'input window, operand 1, single buffered']
    #allocation6 [shape = 's32[1]{0}', space=sflag, size = 0x4, scoped, tag = 'scoped memory for tpu_custom_call.1']
    #allocation7 [shape = 'u8[131072]{0}', space=vmem, size = 0x20000, scoped, tag = 'input window, operand 3, single buffered']
    #allocation8 [shape = 'u8[131072]{0}', space=vmem, size = 0x20000, scoped, tag = 'input window, operand 5, single buffered']
    #allocation9 [shape = 's32[1]{0}', space=sflag, size = 0x4, scoped, tag = 'scoped memory for tpu_custom_call.1']
    #allocation10 [shape = 'u8[32768]{0}', space=vmem, size = 0x8000, scoped, tag = 'input window, operand 7, single buffered']
    #allocation11 [shape = 'u8[4096]{0}', space=vmem, size = 0x1000, scoped, tag = 'output window, operand 0, single buffered']
    %14 = vsyncpa [#allocation3], 0
    %15 = vsyncpa [#allocation6], 0
    %16 = vsyncpa [#allocation9], 0
    %17 = vsyncpa [#allocation4], 0
    // Predicated region
    $region2: #{tpu_custom_call.1} parent=1 // pred_check
      _
    $region3: #{tpu_custom_call.1} parent=1 // pred_check_branch
      %19 = sbr.rel (0) target = $region5
    $region4: #{tpu_custom_call.1} parent=1 // pred_region
      %s21 = ssub.s32 448, 448
      %22 = vsyncadd [#allocation3], %s21
      %s24 = sshll.u32 [#allocation2], 4
      %s25 = int_to_ptr.vmem [resolvable:$true] %s24
      %27 = dma.hbm_to_vmem [thread:$0]  %s0, 448, %s25, [#allocation3]
    $region5: #{tpu_custom_call.1} parent=1 // pred_fallthru
      _
    // Predicated region
    $region6: #{tpu_custom_call.1} parent=1 // pred_check
      _
    $region7: #{tpu_custom_call.1} parent=1 // pred_check_branch
      %29 = sbr.rel (0) target = $region9
    $region8: #{tpu_custom_call.1} parent=1 // pred_region
      %s31 = ssub.s32 6272, 6272
      %32 = vsyncadd [#allocation6], %s31
      %s33 = sshll.u32 [#allocation5], 4
      %s34 = int_to_ptr.vmem [resolvable:$true] %s33
      %39 = dma.hbm_to_vmem [thread:$0]  %s1, 6272, %s34, [#allocation6], 64, 64, 4
    $region9: #{tpu_custom_call.1} parent=1 // pred_fallthru
      _
    // Predicated region
    $region10: #{tpu_custom_call.1} parent=1 // pred_check
      _
    $region11: #{tpu_custom_call.1} parent=1 // pred_check_branch
      %41 = sbr.rel (0) target = $region13
    $region12: #{tpu_custom_call.1} parent=1 // pred_region
      _
    $region13: #{tpu_custom_call.1} parent=1 // pred_fallthru
      _
    // Predicated region
    $region14: #{tpu_custom_call.1} parent=1 // pred_check
      _
    $region15: #{tpu_custom_call.1} parent=1 // pred_check_branch
      %43 = sbr.rel (0) target = $region17
    $region16: #{tpu_custom_call.1} parent=1 // pred_region
      %s45 = ssub.s32 4096, 4096
      %46 = vsyncadd [#allocation6], %s45
      %s47 = sshll.u32 [#allocation7], 4
      %s48 = int_to_ptr.vmem [resolvable:$true] %s47
      %53 = dma.hbm_to_vmem [thread:$0]  %s3, 4096, %s48, [#allocation6], 256, 256, 16
    $region17: #{tpu_custom_call.1} parent=1 // pred_fallthru
      _
    // Predicated region
    $region18: #{tpu_custom_call.1} parent=1 // pred_check
      _
    $region19: #{tpu_custom_call.1} parent=1 // pred_check_branch
      %55 = sbr.rel (0) target = $region21
    $region20: #{tpu_custom_call.1} parent=1 // pred_region
      _
    $region21: #{tpu_custom_call.1} parent=1 // pred_fallthru
      _
    // Predicated region
    $region22: #{tpu_custom_call.1} parent=1 // pred_check
      _
    $region23: #{tpu_custom_call.1} parent=1 // pred_check_branch
      %57 = sbr.rel (0) target = $region25
    $region24: #{tpu_custom_call.1} parent=1 // pred_region
      %s59 = ssub.s32 4096, 4096
      %60 = vsyncadd [#allocation9], %s59
      %s61 = sshll.u32 [#allocation8], 4
      %s62 = int_to_ptr.vmem [resolvable:$true] %s61
      %67 = dma.hbm_to_vmem [thread:$0]  %s5, 4096, %s62, [#allocation9], 64, 64, 4
    $region25: #{tpu_custom_call.1} parent=1 // pred_fallthru
      _
    // Predicated region
    $region26: #{tpu_custom_call.1} parent=1 // pred_check
      _
    $region27: #{tpu_custom_call.1} parent=1 // pred_check_branch
      %69 = sbr.rel (0) target = $region29
    $region28: #{tpu_custom_call.1} parent=1 // pred_region
      _
    $region29: #{tpu_custom_call.1} parent=1 // pred_fallthru
      _
    // Predicated region
    $region30: #{tpu_custom_call.1} parent=1 // pred_check
      _
    $region31: #{tpu_custom_call.1} parent=1 // pred_check_branch
      %71 = sbr.rel (0) target = $region33
    $region32: #{tpu_custom_call.1} parent=1 // pred_region
      %s73 = ssub.s32 1024, 1024
      %74 = vsyncadd [#allocation9], %s73
      %s75 = sshll.u32 [#allocation10], 4
      %s76 = int_to_ptr.vmem [resolvable:$true] %s75
      %81 = dma.hbm_to_vmem [thread:$0]  %s7, 1024, %s76, [#allocation9], 64, 64, 4
    $region33: #{tpu_custom_call.1} parent=1 // pred_fallthru
      _
    // Predicated region
    $region34: #{tpu_custom_call.1} parent=1 // pred_check
      _
    $region35: #{tpu_custom_call.1} parent=1 // pred_check_branch
      %83 = sbr.rel (0) target = $region37
    $region36: #{tpu_custom_call.1} parent=1 // pred_region
      _
    $region37: #{tpu_custom_call.1} parent=1 // pred_fallthru
      _
    // Predicated region
    $region38: #{tpu_custom_call.1} parent=1 // pred_check
      _
    $region39: #{tpu_custom_call.1} parent=1 // pred_check_branch
      %85 = sbr.rel (0) target = $region41
    $region40: #{tpu_custom_call.1} parent=1 // pred_region
      %86 = dma.done [#allocation3], 448
    $region41: #{tpu_custom_call.1} parent=1 // pred_fallthru
      _
    // Predicated region
    $region42: #{tpu_custom_call.1} parent=1 // pred_check
      _
    $region43: #{tpu_custom_call.1} parent=1 // pred_check_branch
      %88 = sbr.rel (0) target = $region45
    $region44: #{tpu_custom_call.1} parent=1 // pred_region
      %89 = dma.done [#allocation6], 6272
    $region45: #{tpu_custom_call.1} parent=1 // pred_fallthru
      _
    // Predicated region
    $region46: #{tpu_custom_call.1} parent=1 // pred_check
      _
    $region47: #{tpu_custom_call.1} parent=1 // pred_check_branch
      %91 = sbr.rel (0) target = $region49
    $region48: #{tpu_custom_call.1} parent=1 // pred_region
      %92 = dma.done [#allocation6], 4096
    $region49: #{tpu_custom_call.1} parent=1 // pred_fallthru
      _
    // Predicated region
    $region50: #{tpu_custom_call.1} parent=1 // pred_check
      _
    $region51: #{tpu_custom_call.1} parent=1 // pred_check_branch
      %94 = sbr.rel (0) target = $region53
    $region52: #{tpu_custom_call.1} parent=1 // pred_region
      %95 = dma.done [#allocation9], 4096
    $region53: #{tpu_custom_call.1} parent=1 // pred_fallthru
      _
    // Predicated region
    $region54: #{tpu_custom_call.1} parent=1 // pred_check
      _
    $region55: #{tpu_custom_call.1} parent=1 // pred_check_branch
      %97 = sbr.rel (0) target = $region57
    $region56: #{tpu_custom_call.1} parent=1 // pred_region
      %98 = dma.done [#allocation9], 1024
    $region57: #{tpu_custom_call.1} parent=1 // pred_fallthru
      _
    %v100 = vld [vmem:[#allocation2] sm:$0xff]
    %v101 = vld [vmem:[#allocation2 + $0x8] sm:$0xff]
    %v102 = vld [vmem:[#allocation2 + $0x10] sm:$0xff]
    %v103 = vld [vmem:[#allocation2 + $0x18] sm:$0xf]
    %v104 = vld [vmem:[#allocation5] sm:$0xf]
    %v105 = vld [vmem:[#allocation5 + $0x4] sm:$0xf]
    %v106 = vld [vmem:[#allocation5 + $0x8] sm:$0xf]
    %v107 = vld [vmem:[#allocation5 + $0xc] sm:$0xf]
    %v108 = vld [vmem:[#allocation5 + $0x10] sm:$0xf]
    %v109 = vld [vmem:[#allocation5 + $0x14] sm:$0xf]
    %v110 = vld [vmem:[#allocation5 + $0x18] sm:$0xf]
    %v111 = vld [vmem:[#allocation5 + $0x1c] sm:$0xf]
    %v112 = vld [vmem:[#allocation5 + $0x20] sm:$0xf]
    %v113 = vld [vmem:[#allocation5 + $0x24] sm:$0xf]
    %v114 = vld [vmem:[#allocation5 + $0x28] sm:$0xf]
    %v115 = vld [vmem:[#allocation5 + $0x2c] sm:$0xf]
    %v116 = vld [vmem:[#allocation5 + $0x30] sm:$0xf]
    %v117 = vld [vmem:[#allocation5 + $0x34] sm:$0xf]
    %v118 = vld [vmem:[#allocation5 + $0x38] sm:$0xf]
    %v119 = vld [vmem:[#allocation5 + $0x3c] sm:$0xf]
    %v120 = vld [vmem:[#allocation5 + $0x40] sm:$0xf]
    %v121 = vld [vmem:[#allocation5 + $0x44] sm:$0xf]
    %v122 = vld [vmem:[#allocation5 + $0x48] sm:$0xf]
    %v123 = vld [vmem:[#allocation5 + $0x4c] sm:$0xf]
    %v124 = vld [vmem:[#allocation5 + $0x50] sm:$0xf]
    %v125 = vld [vmem:[#allocation5 + $0x54] sm:$0xf]
    %v126 = vld [vmem:[#allocation5 + $0x58] sm:$0xf]
    %v127 = vld [vmem:[#allocation5 + $0x5c] sm:$0xf]
    %v128 = vld [vmem:[#allocation5 + $0x60] sm:$0xf]
    %v129 = vld [vmem:[#allocation5 + $0x64] sm:$0xf]
    %v130 = vld [vmem:[#allocation5 + $0x68] sm:$0xf]
    %v131 = vld [vmem:[#allocation5 + $0x6c] sm:$0xf]
    %v132 = vld [vmem:[#allocation5 + $0x70] sm:$0xf]
    %v133 = vld [vmem:[#allocation5 + $0x74] sm:$0xf]
    %v134 = vld [vmem:[#allocation5 + $0x78] sm:$0xf]
    %v135 = vld [vmem:[#allocation5 + $0x7c] sm:$0xf]
    %v136 = vld [vmem:[#allocation5 + $0x80] sm:$0xf]
    %v137 = vld [vmem:[#allocation5 + $0x84] sm:$0xf]
    %v138 = vld [vmem:[#allocation5 + $0x88] sm:$0xf]
    %v139 = vld [vmem:[#allocation5 + $0x8c] sm:$0xf]
    %v140 = vld [vmem:[#allocation5 + $0x90] sm:$0xf]
    %v141 = vld [vmem:[#allocation5 + $0x94] sm:$0xf]
    %v142 = vld [vmem:[#allocation5 + $0x98] sm:$0xf]
    %v143 = vld [vmem:[#allocation5 + $0x9c] sm:$0xf]
    %v144 = vld [vmem:[#allocation5 + $0xa0] sm:$0xf]
    %v145 = vld [vmem:[#allocation5 + $0xa4] sm:$0xf]
    %v146 = vld [vmem:[#allocation5 + $0xa8] sm:$0xf]
    %v147 = vld [vmem:[#allocation5 + $0xac] sm:$0xf]
    %v148 = vld [vmem:[#allocation5 + $0xb0] sm:$0xf]
    %v149 = vld [vmem:[#allocation5 + $0xb4] sm:$0xf]
    %v150 = vld [vmem:[#allocation5 + $0xb8] sm:$0xf]
    %v151 = vld [vmem:[#allocation5 + $0xbc] sm:$0xf]
    %v152 = vld [vmem:[#allocation5 + $0xc0] sm:$0xf]
    %v153 = vld [vmem:[#allocation5 + $0xc4] sm:$0xf]
    %v154 = vld [vmem:[#allocation5 + $0xc8] sm:$0xf]
    %v155 = vld [vmem:[#allocation5 + $0xcc] sm:$0xf]
    %v156 = vld [vmem:[#allocation5 + $0xd0] sm:$0xf]
    %v157 = vld [vmem:[#allocation5 + $0xd4] sm:$0xf]
    %v158 = vld [vmem:[#allocation5 + $0xd8] sm:$0xf]
    %v159 = vld [vmem:[#allocation5 + $0xdc] sm:$0xf]
    %v160 = vld [vmem:[#allocation5 + $0xe0] sm:$0xf]
    %v161 = vld [vmem:[#allocation5 + $0xe4] sm:$0xf]
    %v162 = vld [vmem:[#allocation5 + $0xe8] sm:$0xf]
    %v163 = vld [vmem:[#allocation5 + $0xec] sm:$0xf]
    %v164 = vld [vmem:[#allocation5 + $0xf0] sm:$0xf]
    %v165 = vld [vmem:[#allocation5 + $0xf4] sm:$0xf]
    %v166 = vld [vmem:[#allocation5 + $0xf8] sm:$0xf]
    %v167 = vld [vmem:[#allocation5 + $0xfc] sm:$0xf]
    %v168 = vld [vmem:[#allocation5 + $0x100] sm:$0xf]
    %v169 = vld [vmem:[#allocation5 + $0x104] sm:$0xf]
    %v170 = vld [vmem:[#allocation5 + $0x108] sm:$0xf]
    %v171 = vld [vmem:[#allocation5 + $0x10c] sm:$0xf]
    %v172 = vld [vmem:[#allocation5 + $0x110] sm:$0xf]
    %v173 = vld [vmem:[#allocation5 + $0x114] sm:$0xf]
    %v174 = vld [vmem:[#allocation5 + $0x118] sm:$0xf]
    %v175 = vld [vmem:[#allocation5 + $0x11c] sm:$0xf]
    %v176 = vld [vmem:[#allocation5 + $0x120] sm:$0xf]
    %v177 = vld [vmem:[#allocation5 + $0x124] sm:$0xf]
    %v178 = vld [vmem:[#allocation5 + $0x128] sm:$0xf]
    %v179 = vld [vmem:[#allocation5 + $0x12c] sm:$0xf]
    %v180 = vld [vmem:[#allocation5 + $0x130] sm:$0xf]
    %v181 = vld [vmem:[#allocation5 + $0x134] sm:$0xf]
    %v182 = vld [vmem:[#allocation5 + $0x138] sm:$0xf]
    %v183 = vld [vmem:[#allocation5 + $0x13c] sm:$0xf]
    %v184 = vld [vmem:[#allocation5 + $0x140] sm:$0xf]
    %v185 = vld [vmem:[#allocation5 + $0x144] sm:$0xf]
    %v186 = vld [vmem:[#allocation5 + $0x148] sm:$0xf]
    %v187 = vld [vmem:[#allocation5 + $0x14c] sm:$0xf]
    %v188 = vld [vmem:[#allocation5 + $0x150] sm:$0xf]
    %v189 = vld [vmem:[#allocation5 + $0x154] sm:$0xf]
    %v190 = vld [vmem:[#allocation5 + $0x158] sm:$0xf]
    %v191 = vld [vmem:[#allocation5 + $0x15c] sm:$0xf]
    %v192 = vld [vmem:[#allocation5 + $0x160] sm:$0xf]
    %v193 = vld [vmem:[#allocation5 + $0x164] sm:$0xf]
    %v194 = vld [vmem:[#allocation5 + $0x168] sm:$0xf]
    %v195 = vld [vmem:[#allocation5 + $0x16c] sm:$0xf]
    %v196 = vld [vmem:[#allocation5 + $0x170] sm:$0xf]
    %v197 = vld [vmem:[#allocation5 + $0x174] sm:$0xf]
    %v198 = vld [vmem:[#allocation5 + $0x178] sm:$0xf]
    %v199 = vld [vmem:[#allocation5 + $0x17c] sm:$0xf]
    %v200 = vld [vmem:[#allocation5 + $0x180] sm:$0xf]
    %v201 = vld [vmem:[#allocation5 + $0x184] sm:$0xf]
    %v202 = vld [vmem:[%s2] sm:$0x1]
    %v204 = vlaneseq
    %v205 = vshrl.u32 %v204, 7
    %v206 = vsub.s32 0, %v205
    %v207 = vrot.slane %v202, %v206
    %v213 = vunpack.c.l.b16 %v100
    %v214 = vunpack.c.h.b16 %v100
    %v215 = vunpack.c.l.b16 %v101
    %v216 = vunpack.c.h.b16 %v101
    %v217 = vunpack.c.l.b16 %v102
    %v218 = vunpack.c.h.b16 %v102
    %v219 = vunpack.c.l.b16 %v103
    %v220 = vpack.c.b16 %v213, %v213
    %v221 = vpack.c.b16 %v214, %v214
    %v222 = vpack.c.b16 %v215, %v215
    %v223 = vpack.c.b16 %v216, %v216
    %v224 = vpack.c.b16 %v217, %v217
    %v225 = vpack.c.b16 %v218, %v218
    %v226 = vpack.c.b16 %v219, %v219
    %v331 = vunpack.c.l.b16 %v104
    %v332 = vunpack.c.l.b16 %v105
    %v333 = vunpack.c.l.b16 %v106
    %v334 = vunpack.c.l.b16 %v107
    %v335 = vunpack.c.l.b16 %v108
    %v336 = vunpack.c.l.b16 %v109
    %v337 = vunpack.c.l.b16 %v110
    %v338 = vunpack.c.l.b16 %v111
    %v339 = vunpack.c.l.b16 %v112
    %v340 = vunpack.c.l.b16 %v113
    %v341 = vunpack.c.l.b16 %v114
    %v342 = vunpack.c.l.b16 %v115
    %v343 = vunpack.c.l.b16 %v116
    %v344 = vunpack.c.l.b16 %v117
    %v345 = vunpack.c.l.b16 %v118
    %v346 = vunpack.c.l.b16 %v119
    %v347 = vunpack.c.l.b16 %v120
    %v348 = vunpack.c.l.b16 %v121
    %v349 = vunpack.c.l.b16 %v122
    %v350 = vunpack.c.l.b16 %v123
    %v351 = vunpack.c.l.b16 %v124
    %v352 = vunpack.c.l.b16 %v125
    %v353 = vunpack.c.l.b16 %v126
    %v354 = vunpack.c.l.b16 %v127
    %v355 = vunpack.c.l.b16 %v128
    %v356 = vunpack.c.l.b16 %v129
    %v357 = vunpack.c.l.b16 %v130
    %v358 = vunpack.c.l.b16 %v131
    %v359 = vunpack.c.l.b16 %v132
    %v360 = vunpack.c.l.b16 %v133
    %v361 = vunpack.c.l.b16 %v134
    %v362 = vunpack.c.l.b16 %v135
    %v363 = vunpack.c.l.b16 %v136
    %v364 = vunpack.c.l.b16 %v137
    %v365 = vunpack.c.l.b16 %v138
    %v366 = vunpack.c.l.b16 %v139
    %v367 = vunpack.c.l.b16 %v140
    %v368 = vunpack.c.l.b16 %v141
    %v369 = vunpack.c.l.b16 %v142
    %v370 = vunpack.c.l.b16 %v143
    %v371 = vunpack.c.l.b16 %v144
    %v372 = vunpack.c.l.b16 %v145
    %v373 = vunpack.c.l.b16 %v146
    %v374 = vunpack.c.l.b16 %v147
    %v375 = vunpack.c.l.b16 %v148
    %v376 = vunpack.c.l.b16 %v149
    %v377 = vunpack.c.l.b16 %v150
    %v378 = vunpack.c.l.b16 %v151
    %v379 = vunpack.c.l.b16 %v152
    %v380 = vunpack.c.l.b16 %v153
    %v381 = vunpack.c.l.b16 %v154
    %v382 = vunpack.c.l.b16 %v155
    %v383 = vunpack.c.l.b16 %v156
    %v384 = vunpack.c.l.b16 %v157
    %v385 = vunpack.c.l.b16 %v158
    %v386 = vunpack.c.l.b16 %v159
    %v387 = vunpack.c.l.b16 %v160
    %v388 = vunpack.c.l.b16 %v161
    %v389 = vunpack.c.l.b16 %v162
    %v390 = vunpack.c.l.b16 %v163
    %v391 = vunpack.c.l.b16 %v164
    %v392 = vunpack.c.l.b16 %v165
    %v393 = vunpack.c.l.b16 %v166
    %v394 = vunpack.c.l.b16 %v167
    %v395 = vunpack.c.l.b16 %v168
    %v396 = vunpack.c.l.b16 %v169
    %v397 = vunpack.c.l.b16 %v170
    %v398 = vunpack.c.l.b16 %v171
    %v399 = vunpack.c.l.b16 %v172
    %v400 = vunpack.c.l.b16 %v173
    %v401 = vunpack.c.l.b16 %v174
    %v402 = vunpack.c.l.b16 %v175
    %v403 = vunpack.c.l.b16 %v176
    %v404 = vunpack.c.l.b16 %v177
    %v405 = vunpack.c.l.b16 %v178
    %v406 = vunpack.c.l.b16 %v179
    %v407 = vunpack.c.l.b16 %v180
    %v408 = vunpack.c.l.b16 %v181
    %v409 = vunpack.c.l.b16 %v182
    %v410 = vunpack.c.l.b16 %v183
    %v411 = vunpack.c.l.b16 %v184
    %v412 = vunpack.c.l.b16 %v185
    %v413 = vunpack.c.l.b16 %v186
    %v414 = vunpack.c.l.b16 %v187
    %v415 = vunpack.c.l.b16 %v188
    %v416 = vunpack.c.l.b16 %v189
    %v417 = vunpack.c.l.b16 %v190
    %v418 = vunpack.c.l.b16 %v191
    %v419 = vunpack.c.l.b16 %v192
    %v420 = vunpack.c.l.b16 %v193
    %v421 = vunpack.c.l.b16 %v194
    %v422 = vunpack.c.l.b16 %v195
    %v423 = vunpack.c.l.b16 %v196
    %v424 = vunpack.c.l.b16 %v197
    %v425 = vunpack.c.l.b16 %v198
    %v426 = vunpack.c.l.b16 %v199
    %v427 = vunpack.c.l.b16 %v200
    %v428 = vunpack.c.l.b16 %v201
    %v429 = vpack.c.b16 %v332, %v331
    %v430 = vpack.c.b16 %v334, %v333
    %v431 = vpack.c.b16 %v336, %v335
    %v432 = vpack.c.b16 %v338, %v337
    %v433 = vpack.c.b16 %v340, %v339
    %v434 = vpack.c.b16 %v342, %v341
    %v435 = vpack.c.b16 %v344, %v343
    %v436 = vpack.c.b16 %v346, %v345
    %v437 = vpack.c.b16 %v348, %v347
    %v438 = vpack.c.b16 %v350, %v349
    %v439 = vpack.c.b16 %v352, %v351
    %v440 = vpack.c.b16 %v354, %v353
    %v441 = vpack.c.b16 %v356, %v355
    %v442 = vpack.c.b16 %v358, %v357
    %v443 = vpack.c.b16 %v360, %v359
    %v444 = vpack.c.b16 %v362, %v361
    %v445 = vpack.c.b16 %v364, %v363
    %v446 = vpack.c.b16 %v366, %v365
    %v447 = vpack.c.b16 %v368, %v367
    %v448 = vpack.c.b16 %v370, %v369
    %v449 = vpack.c.b16 %v372, %v371
    %v450 = vpack.c.b16 %v374, %v373
    %v451 = vpack.c.b16 %v376, %v375
    %v452 = vpack.c.b16 %v378, %v377
    %v453 = vpack.c.b16 %v380, %v379
    %v454 = vpack.c.b16 %v382, %v381
    %v455 = vpack.c.b16 %v384, %v383
    %v456 = vpack.c.b16 %v386, %v385
    %v457 = vpack.c.b16 %v388, %v387
    %v458 = vpack.c.b16 %v390, %v389
    %v459 = vpack.c.b16 %v392, %v391
    %v460 = vpack.c.b16 %v394, %v393
    %v461 = vpack.c.b16 %v396, %v395
    %v462 = vpack.c.b16 %v398, %v397
    %v463 = vpack.c.b16 %v400, %v399
    %v464 = vpack.c.b16 %v402, %v401
    %v465 = vpack.c.b16 %v404, %v403
    %v466 = vpack.c.b16 %v406, %v405
    %v467 = vpack.c.b16 %v408, %v407
    %v468 = vpack.c.b16 %v410, %v409
    %v469 = vpack.c.b16 %v412, %v411
    %v470 = vpack.c.b16 %v414, %v413
    %v471 = vpack.c.b16 %v416, %v415
    %v472 = vpack.c.b16 %v418, %v417
    %v473 = vpack.c.b16 %v420, %v419
    %v474 = vpack.c.b16 %v422, %v421
    %v475 = vpack.c.b16 %v424, %v423
    %v476 = vpack.c.b16 %v426, %v425
    %v477 = vpack.c.b16 %v428, %v427
    %vm527 = vcmask 130048
    %v529 = vsel %vm527, %v226, 0
    %531 = vmatprep.subr.bf16.mxu0 0
    %532 = vmatpush1.bf16.msra.mxu0 %v436
    %533 = vmatprep.subr.bf16.mxu0 0
    %534 = vmatpush1.bf16.msra.mxu0 %v435
    %535 = vmatprep.subr.bf16.mxu0 0
    %536 = vmatpush1.bf16.msra.mxu0 %v434
    %537 = vmatprep.subr.bf16.mxu0 0
    %538 = vmatpush1.bf16.msra.mxu0 %v433
    %539 = vmatprep.subr.bf16.mxu0 0
    %540 = vmatpush1.bf16.msra.mxu0 %v432
    %541 = vmatprep.subr.bf16.mxu0 0
    %542 = vmatpush1.bf16.msra.mxu0 %v431
    %543 = vmatprep.subr.bf16.mxu0 0
    %544 = vmatpush1.bf16.msra.mxu0 %v430
    %545 = vmatprep.subr.bf16.mxu0 0
    %546 = vmatpush1.bf16.msra.mxu0 %v429
    %547 = vmatprep.subr.bf16.mxu0 0
    %548 = vmatpush2.bf16.msra.mxu0 %v444
    %549 = vmatprep.subr.bf16.mxu0 0
    %550 = vmatpush2.bf16.msra.mxu0 %v443
    %551 = vmatprep.subr.bf16.mxu0 0
    %552 = vmatpush2.bf16.msra.mxu0 %v442
    %553 = vmatprep.subr.bf16.mxu0 0
    %554 = vmatpush2.bf16.msra.mxu0 %v441
    %555 = vmatprep.subr.bf16.mxu0 0
    %556 = vmatpush2.bf16.msra.mxu0 %v440
    %557 = vmatprep.subr.bf16.mxu0 0
    %558 = vmatpush2.bf16.msra.mxu0 %v439
    %559 = vmatprep.subr.bf16.mxu0 0
    %560 = vmatpush2.bf16.msra.mxu0 %v438
    %561 = vmatprep.subr.bf16.mxu0 0
    %562 = vmatpush2.bf16.msra.mxu0 %v437
    %563 = vmatprep.mubr.bf16.mxu0 %v221
    %564 = vmatmul.mubr.bf16.gmra.mxu0 %v220
    %v565 = vpop.f32.mrf.mxu0
    %v566 = vadd.f32 %v207, %v565
    %v567 = vpop.f32.mrf.mxu0
    %v568 = vpop.f32.mrf.mxu0
    %v569 = vpop.f32.mrf.mxu0
    %570 = vdwg.mxu0
    %571 = vmatprep.subr.bf16.mxu0 0
    %572 = vmatpush1.bf16.msra.mxu0 %v452
    %573 = vmatprep.subr.bf16.mxu0 0
    %574 = vmatpush1.bf16.msra.mxu0 %v451
    %575 = vmatprep.subr.bf16.mxu0 0
    %576 = vmatpush1.bf16.msra.mxu0 %v450
    %577 = vmatprep.subr.bf16.mxu0 0
    %578 = vmatpush1.bf16.msra.mxu0 %v449
    %579 = vmatprep.subr.bf16.mxu0 0
    %580 = vmatpush1.bf16.msra.mxu0 %v448
    %581 = vmatprep.subr.bf16.mxu0 0
    %582 = vmatpush1.bf16.msra.mxu0 %v447
    %583 = vmatprep.subr.bf16.mxu0 0
    %584 = vmatpush1.bf16.msra.mxu0 %v446
    %585 = vmatprep.subr.bf16.mxu0 0
    %586 = vmatpush1.bf16.msra.mxu0 %v445
    %587 = vmatprep.subr.bf16.mxu0 0
    %588 = vmatpush2.bf16.msra.mxu0 %v460
    %589 = vmatprep.subr.bf16.mxu0 0
    %590 = vmatpush2.bf16.msra.mxu0 %v459
    %591 = vmatprep.subr.bf16.mxu0 0
    %592 = vmatpush2.bf16.msra.mxu0 %v458
    %593 = vmatprep.subr.bf16.mxu0 0
    %594 = vmatpush2.bf16.msra.mxu0 %v457
    %595 = vmatprep.subr.bf16.mxu0 0
    %596 = vmatpush2.bf16.msra.mxu0 %v456
    %597 = vmatprep.subr.bf16.mxu0 0
    %598 = vmatpush2.bf16.msra.mxu0 %v455
    %599 = vmatprep.subr.bf16.mxu0 0
    %600 = vmatpush2.bf16.msra.mxu0 %v454
    %601 = vmatprep.subr.bf16.mxu0 0
    %602 = vmatpush2.bf16.msra.mxu0 %v453
    %603 = vmatprep.mubr.bf16.mxu0 %v223
    %604 = vmatmul.mubr.bf16.gmra.mxu0 %v222
    %v605 = vpop.f32.mrf.mxu0
    %v606 = vadd.f32 %v566, %v605
    %v607 = vpop.f32.mrf.mxu0
    %v608 = vpop.f32.mrf.mxu0
    %v609 = vpop.f32.mrf.mxu0
    %610 = vdwg.mxu0
    %611 = vmatprep.subr.bf16.mxu0 0
    %612 = vmatpush1.bf16.msra.mxu0 %v468
    %613 = vmatprep.subr.bf16.mxu0 0
    %614 = vmatpush1.bf16.msra.mxu0 %v467
    %615 = vmatprep.subr.bf16.mxu0 0
    %616 = vmatpush1.bf16.msra.mxu0 %v466
    %617 = vmatprep.subr.bf16.mxu0 0
    %618 = vmatpush1.bf16.msra.mxu0 %v465
    %619 = vmatprep.subr.bf16.mxu0 0
    %620 = vmatpush1.bf16.msra.mxu0 %v464
    %621 = vmatprep.subr.bf16.mxu0 0
    %622 = vmatpush1.bf16.msra.mxu0 %v463
    %623 = vmatprep.subr.bf16.mxu0 0
    %624 = vmatpush1.bf16.msra.mxu0 %v462
    %625 = vmatprep.subr.bf16.mxu0 0
    %626 = vmatpush1.bf16.msra.mxu0 %v461
    %627 = vmatprep.subr.bf16.mxu0 0
    %628 = vmatpush2.bf16.msra.mxu0 %v476
    %629 = vmatprep.subr.bf16.mxu0 0
    %630 = vmatpush2.bf16.msra.mxu0 %v475
    %631 = vmatprep.subr.bf16.mxu0 0
    %632 = vmatpush2.bf16.msra.mxu0 %v474
    %633 = vmatprep.subr.bf16.mxu0 0
    %634 = vmatpush2.bf16.msra.mxu0 %v473
    %635 = vmatprep.subr.bf16.mxu0 0
    %636 = vmatpush2.bf16.msra.mxu0 %v472
    %637 = vmatprep.subr.bf16.mxu0 0
    %638 = vmatpush2.bf16.msra.mxu0 %v471
    %639 = vmatprep.subr.bf16.mxu0 0
    %640 = vmatpush2.bf16.msra.mxu0 %v470
    %641 = vmatprep.subr.bf16.mxu0 0
    %642 = vmatpush2.bf16.msra.mxu0 %v469
    %643 = vmatprep.mubr.bf16.mxu0 %v225
    %644 = vmatmul.mubr.bf16.gmra.mxu0 %v224
    %v645 = vpop.f32.mrf.mxu0
    %v646 = vadd.f32 %v606, %v645
    %v647 = vpop.f32.mrf.mxu0
    %v648 = vpop.f32.mrf.mxu0
    %v649 = vpop.f32.mrf.mxu0
    %650 = vdwg.mxu0
    %651 = vmatprep.subr.bf16.mxu0 0
    %652 = vmatpush1.bf16.msra.mxu0 0
    %653 = vmatprep.subr.bf16.mxu0 0
    %654 = vmatpush1.bf16.msra.mxu0 0
    %655 = vmatprep.subr.bf16.mxu0 0
    %656 = vmatpush1.bf16.msra.mxu0 0
    %657 = vmatprep.subr.bf16.mxu0 0
    %658 = vmatpush1.bf16.msra.mxu0 0
    %659 = vmatprep.subr.bf16.mxu0 0
    %660 = vmatpush1.bf16.msra.mxu0 0
    %661 = vmatprep.subr.bf16.mxu0 0
    %662 = vmatpush1.bf16.msra.mxu0 0
    %663 = vmatprep.subr.bf16.mxu0 0
    %664 = vmatpush1.bf16.msra.mxu0 0
    %665 = vmatprep.subr.bf16.mxu0 0
    %666 = vmatpush1.bf16.msra.mxu0 %v477
    %667 = vmatprep.subr.bf16.mxu0 0
    %668 = vmatpush2.bf16.msra.mxu0 0
    %669 = vmatprep.subr.bf16.mxu0 0
    %670 = vmatpush2.bf16.msra.mxu0 0
    %671 = vmatprep.subr.bf16.mxu0 0
    %672 = vmatpush2.bf16.msra.mxu0 0
    %673 = vmatprep.subr.bf16.mxu0 0
    %674 = vmatpush2.bf16.msra.mxu0 0
    %675 = vmatprep.subr.bf16.mxu0 0
    %676 = vmatpush2.bf16.msra.mxu0 0
    %677 = vmatprep.subr.bf16.mxu0 0
    %678 = vmatpush2.bf16.msra.mxu0 0
    %679 = vmatprep.subr.bf16.mxu0 0
    %680 = vmatpush2.bf16.msra.mxu0 0
    %681 = vmatprep.subr.bf16.mxu0 0
    %682 = vmatpush2.bf16.msra.mxu0 0
    %683 = vmatprep.mubr.bf16.mxu0 0
    %684 = vmatmul.mubr.bf16.gmra.mxu0 %v529
    %v685 = vpop.f32.mrf.mxu0
    %v686 = vadd.f32 %v646, %v685
    %v687 = vpop.f32.mrf.mxu0
    %v688 = vpop.f32.mrf.mxu0
    %v689 = vpop.f32.mrf.mxu0
    %690 = vdwg.mxu0
    %v691 = vmax.f32 %v686, 0.0
    %v692 = vpack.c.bf16 %v691, %v691
    %v693 = vld [vmem:[#allocation7] sm:$0xff]
    %v694 = vld [vmem:[#allocation7 + $0x8] sm:$0xff]
    %v695 = vld [vmem:[#allocation7 + $0x10] sm:$0xff]
    %v696 = vld [vmem:[#allocation7 + $0x18] sm:$0xff]
    %v697 = vld [vmem:[#allocation7 + $0x20] sm:$0xff]
    %v698 = vld [vmem:[#allocation7 + $0x28] sm:$0xff]
    %v699 = vld [vmem:[#allocation7 + $0x30] sm:$0xff]
    %v700 = vld [vmem:[#allocation7 + $0x38] sm:$0xff]
    %v701 = vld [vmem:[#allocation7 + $0x40] sm:$0xff]
    %v702 = vld [vmem:[#allocation7 + $0x48] sm:$0xff]
    %v703 = vld [vmem:[#allocation7 + $0x50] sm:$0xff]
    %v704 = vld [vmem:[#allocation7 + $0x58] sm:$0xff]
    %v705 = vld [vmem:[#allocation7 + $0x60] sm:$0xff]
    %v706 = vld [vmem:[#allocation7 + $0x68] sm:$0xff]
    %v707 = vld [vmem:[#allocation7 + $0x70] sm:$0xff]
    %v708 = vld [vmem:[#allocation7 + $0x78] sm:$0xff]
    %v709 = vld [vmem:[#allocation7 + $0x80] sm:$0xff]
    %v710 = vld [vmem:[#allocation7 + $0x88] sm:$0xff]
    %v711 = vld [vmem:[#allocation7 + $0x90] sm:$0xff]
    %v712 = vld [vmem:[#allocation7 + $0x98] sm:$0xff]
    %v713 = vld [vmem:[#allocation7 + $0xa0] sm:$0xff]
    %v714 = vld [vmem:[#allocation7 + $0xa8] sm:$0xff]
    %v715 = vld [vmem:[#allocation7 + $0xb0] sm:$0xff]
    %v716 = vld [vmem:[#allocation7 + $0xb8] sm:$0xff]
    %v717 = vld [vmem:[#allocation7 + $0xc0] sm:$0xff]
    %v718 = vld [vmem:[#allocation7 + $0xc8] sm:$0xff]
    %v719 = vld [vmem:[#allocation7 + $0xd0] sm:$0xff]
    %v720 = vld [vmem:[#allocation7 + $0xd8] sm:$0xff]
    %v721 = vld [vmem:[#allocation7 + $0xe0] sm:$0xff]
    %v722 = vld [vmem:[#allocation7 + $0xe8] sm:$0xff]
    %v723 = vld [vmem:[#allocation7 + $0xf0] sm:$0xff]
    %v724 = vld [vmem:[#allocation7 + $0xf8] sm:$0xff]
    %v725 = vld [vmem:[%s4] sm:$0xf]
    %v727 = vlaneseq
    %v728 = vshrl.u32 %v727, 7
    %v729 = vsub.s32 0, %v728
    %v730 = vrot.slane %v725, %v729
    %v731 = vlaneseq
    %v732 = vshrl.u32 %v731, 7
    %v733 = vsub.s32 1, %v732
    %v734 = vrot.slane %v725, %v733
    %v735 = vlaneseq
    %v736 = vshrl.u32 %v735, 7
    %v737 = vsub.s32 2, %v736
    %v738 = vrot.slane %v725, %v737
    %v739 = vlaneseq
    %v740 = vshrl.u32 %v739, 7
    %v741 = vsub.s32 3, %v740
    %v742 = vrot.slane %v725, %v741
    %v779 = vunpack.c.l.b16 %v693
    %v780 = vunpack.c.h.b16 %v693
    %v781 = vunpack.c.l.b16 %v694
    %v782 = vunpack.c.h.b16 %v694
    %v783 = vunpack.c.l.b16 %v695
    %v784 = vunpack.c.h.b16 %v695
    %v785 = vunpack.c.l.b16 %v696
    %v786 = vunpack.c.h.b16 %v696
    %v787 = vunpack.c.l.b16 %v697
    %v788 = vunpack.c.h.b16 %v697
    %v789 = vunpack.c.l.b16 %v698
    %v790 = vunpack.c.h.b16 %v698
    %v791 = vunpack.c.l.b16 %v699
    %v792 = vunpack.c.h.b16 %v699
    %v793 = vunpack.c.l.b16 %v700
    %v794 = vunpack.c.h.b16 %v700
    %v795 = vunpack.c.l.b16 %v701
    %v796 = vunpack.c.h.b16 %v701
    %v797 = vunpack.c.l.b16 %v702
    %v798 = vunpack.c.h.b16 %v702
    %v799 = vunpack.c.l.b16 %v703
    %v800 = vunpack.c.h.b16 %v703
    %v801 = vunpack.c.l.b16 %v704
    %v802 = vunpack.c.h.b16 %v704
    %v803 = vunpack.c.l.b16 %v705
    %v804 = vunpack.c.h.b16 %v705
    %v805 = vunpack.c.l.b16 %v706
    %v806 = vunpack.c.h.b16 %v706
    %v807 = vunpack.c.l.b16 %v707
    %v808 = vunpack.c.h.b16 %v707
    %v809 = vunpack.c.l.b16 %v708
    %v810 = vunpack.c.h.b16 %v708
    %v811 = vunpack.c.l.b16 %v709
    %v812 = vunpack.c.h.b16 %v709
    %v813 = vunpack.c.l.b16 %v710
    %v814 = vunpack.c.h.b16 %v710
    %v815 = vunpack.c.l.b16 %v711
    %v816 = vunpack.c.h.b16 %v711
    %v817 = vunpack.c.l.b16 %v712
    %v818 = vunpack.c.h.b16 %v712
    %v819 = vunpack.c.l.b16 %v713
    %v820 = vunpack.c.h.b16 %v713
    %v821 = vunpack.c.l.b16 %v714
    %v822 = vunpack.c.h.b16 %v714
    %v823 = vunpack.c.l.b16 %v715
    %v824 = vunpack.c.h.b16 %v715
    %v825 = vunpack.c.l.b16 %v716
    %v826 = vunpack.c.h.b16 %v716
    %v827 = vunpack.c.l.b16 %v717
    %v828 = vunpack.c.h.b16 %v717
    %v829 = vunpack.c.l.b16 %v718
    %v830 = vunpack.c.h.b16 %v718
    %v831 = vunpack.c.l.b16 %v719
    %v832 = vunpack.c.h.b16 %v719
    %v833 = vunpack.c.l.b16 %v720
    %v834 = vunpack.c.h.b16 %v720
    %v835 = vunpack.c.l.b16 %v721
    %v836 = vunpack.c.h.b16 %v721
    %v837 = vunpack.c.l.b16 %v722
    %v838 = vunpack.c.h.b16 %v722
    %v839 = vunpack.c.l.b16 %v723
    %v840 = vunpack.c.h.b16 %v723
    %v841 = vunpack.c.l.b16 %v724
    %v842 = vunpack.c.h.b16 %v724
    %v843 = vpack.c.b16 %v783, %v779
    %v844 = vpack.c.b16 %v784, %v780
    %v845 = vpack.c.b16 %v785, %v781
    %v846 = vpack.c.b16 %v786, %v782
    %v847 = vpack.c.b16 %v791, %v787
    %v848 = vpack.c.b16 %v792, %v788
    %v849 = vpack.c.b16 %v793, %v789
    %v850 = vpack.c.b16 %v794, %v790
    %v851 = vpack.c.b16 %v799, %v795
    %v852 = vpack.c.b16 %v800, %v796
    %v853 = vpack.c.b16 %v801, %v797
    %v854 = vpack.c.b16 %v802, %v798
    %v855 = vpack.c.b16 %v807, %v803
    %v856 = vpack.c.b16 %v808, %v804
    %v857 = vpack.c.b16 %v809, %v805
    %v858 = vpack.c.b16 %v810, %v806
    %v859 = vpack.c.b16 %v815, %v811
    %v860 = vpack.c.b16 %v816, %v812
    %v861 = vpack.c.b16 %v817, %v813
    %v862 = vpack.c.b16 %v818, %v814
    %v863 = vpack.c.b16 %v823, %v819
    %v864 = vpack.c.b16 %v824, %v820
    %v865 = vpack.c.b16 %v825, %v821
    %v866 = vpack.c.b16 %v826, %v822
    %v867 = vpack.c.b16 %v831, %v827
    %v868 = vpack.c.b16 %v832, %v828
    %v869 = vpack.c.b16 %v833, %v829
    %v870 = vpack.c.b16 %v834, %v830
    %v871 = vpack.c.b16 %v839, %v835
    %v872 = vpack.c.b16 %v840, %v836
    %v873 = vpack.c.b16 %v841, %v837
    %v874 = vpack.c.b16 %v842, %v838
    %907 = vmatprep.subr.bf16.mxu0 %v872
    %908 = vmatpush1.bf16.msra.mxu0 %v871
    %909 = vmatprep.subr.bf16.mxu0 %v868
    %910 = vmatpush1.bf16.msra.mxu0 %v867
    %911 = vmatprep.subr.bf16.mxu0 %v864
    %912 = vmatpush1.bf16.msra.mxu0 %v863
    %913 = vmatprep.subr.bf16.mxu0 %v860
    %914 = vmatpush1.bf16.msra.mxu0 %v859
    %915 = vmatprep.subr.bf16.mxu0 %v856
    %916 = vmatpush1.bf16.msra.mxu0 %v855
    %917 = vmatprep.subr.bf16.mxu0 %v852
    %918 = vmatpush1.bf16.msra.mxu0 %v851
    %919 = vmatprep.subr.bf16.mxu0 %v848
    %920 = vmatpush1.bf16.msra.mxu0 %v847
    %921 = vmatprep.subr.bf16.mxu0 %v844
    %922 = vmatpush1.bf16.msra.mxu0 %v843
    %923 = vmatprep.subr.bf16.mxu0 0
    %924 = vmatpush2.bf16.msra.mxu0 0
    %925 = vmatprep.subr.bf16.mxu0 0
    %926 = vmatpush2.bf16.msra.mxu0 0
    %927 = vmatprep.subr.bf16.mxu0 0
    %928 = vmatpush2.bf16.msra.mxu0 0
    %929 = vmatprep.subr.bf16.mxu0 0
    %930 = vmatpush2.bf16.msra.mxu0 0
    %931 = vmatprep.subr.bf16.mxu0 0
    %932 = vmatpush2.bf16.msra.mxu0 0
    %933 = vmatprep.subr.bf16.mxu0 0
    %934 = vmatpush2.bf16.msra.mxu0 0
    %935 = vmatprep.subr.bf16.mxu0 0
    %936 = vmatpush2.bf16.msra.mxu0 0
    %937 = vmatprep.subr.bf16.mxu0 0
    %938 = vmatpush2.bf16.msra.mxu0 0
    %939 = vmatprep.mubr.bf16.mxu0 0
    %940 = vmatmul.mubr.bf16.gmra.mxu0 %v692
    %v941 = vpop.f32.mrf.mxu0
    %v942 = vadd.f32 %v730, %v941
    %v943 = vpop.f32.mrf.mxu0
    %v944 = vadd.f32 %v734, %v943
    %v945 = vpop.f32.mrf.mxu0
    %v946 = vpop.f32.mrf.mxu0
    %947 = vdwg.mxu0
    %948 = vmatprep.subr.bf16.mxu0 %v874
    %949 = vmatpush1.bf16.msra.mxu0 %v873
    %950 = vmatprep.subr.bf16.mxu0 %v870
    %951 = vmatpush1.bf16.msra.mxu0 %v869
    %952 = vmatprep.subr.bf16.mxu0 %v866
    %953 = vmatpush1.bf16.msra.mxu0 %v865
    %954 = vmatprep.subr.bf16.mxu0 %v862
    %955 = vmatpush1.bf16.msra.mxu0 %v861
    %956 = vmatprep.subr.bf16.mxu0 %v858
    %957 = vmatpush1.bf16.msra.mxu0 %v857
    %958 = vmatprep.subr.bf16.mxu0 %v854
    %959 = vmatpush1.bf16.msra.mxu0 %v853
    %960 = vmatprep.subr.bf16.mxu0 %v850
    %961 = vmatpush1.bf16.msra.mxu0 %v849
    %962 = vmatprep.subr.bf16.mxu0 %v846
    %963 = vmatpush1.bf16.msra.mxu0 %v845
    %964 = vmatprep.subr.bf16.mxu0 0
    %965 = vmatpush2.bf16.msra.mxu0 0
    %966 = vmatprep.subr.bf16.mxu0 0
    %967 = vmatpush2.bf16.msra.mxu0 0
    %968 = vmatprep.subr.bf16.mxu0 0
    %969 = vmatpush2.bf16.msra.mxu0 0
    %970 = vmatprep.subr.bf16.mxu0 0
    %971 = vmatpush2.bf16.msra.mxu0 0
    %972 = vmatprep.subr.bf16.mxu0 0
    %973 = vmatpush2.bf16.msra.mxu0 0
    %974 = vmatprep.subr.bf16.mxu0 0
    %975 = vmatpush2.bf16.msra.mxu0 0
    %976 = vmatprep.subr.bf16.mxu0 0
    %977 = vmatpush2.bf16.msra.mxu0 0
    %978 = vmatprep.subr.bf16.mxu0 0
    %979 = vmatpush2.bf16.msra.mxu0 0
    %980 = vmatprep.mubr.bf16.mxu0 0
    %981 = vmatmul.mubr.bf16.gmra.mxu0 %v692
    %v982 = vpop.f32.mrf.mxu0
    %v983 = vadd.f32 %v738, %v982
    %v984 = vpop.f32.mrf.mxu0
    %v985 = vadd.f32 %v742, %v984
    %v986 = vpop.f32.mrf.mxu0
    %v987 = vpop.f32.mrf.mxu0
    %988 = vdwg.mxu0
    %v989 = vmax.f32 %v942, 0.0
    %v990 = vmax.f32 %v944, 0.0
    %v991 = vmax.f32 %v983, 0.0
    %v992 = vmax.f32 %v985, 0.0
    %v993 = vpack.c.bf16 %v989, %v989
    %v994 = vpack.c.bf16 %v990, %v990
    %v995 = vpack.c.bf16 %v991, %v991
    %v996 = vpack.c.bf16 %v992, %v992
    %v997 = vld [vmem:[#allocation8] sm:$0xf]
    %v998 = vld [vmem:[#allocation8 + $0x4] sm:$0xf]
    %v999 = vld [vmem:[#allocation8 + $0x8] sm:$0xf]
    %v1000 = vld [vmem:[#allocation8 + $0xc] sm:$0xf]
    %v1001 = vld [vmem:[#allocation8 + $0x10] sm:$0xf]
    %v1002 = vld [vmem:[#allocation8 + $0x14] sm:$0xf]
    %v1003 = vld [vmem:[#allocation8 + $0x18] sm:$0xf]
    %v1004 = vld [vmem:[#allocation8 + $0x1c] sm:$0xf]
    %v1005 = vld [vmem:[#allocation8 + $0x20] sm:$0xf]
    %v1006 = vld [vmem:[#allocation8 + $0x24] sm:$0xf]
    %v1007 = vld [vmem:[#allocation8 + $0x28] sm:$0xf]
    %v1008 = vld [vmem:[#allocation8 + $0x2c] sm:$0xf]
    %v1009 = vld [vmem:[#allocation8 + $0x30] sm:$0xf]
    %v1010 = vld [vmem:[#allocation8 + $0x34] sm:$0xf]
    %v1011 = vld [vmem:[#allocation8 + $0x38] sm:$0xf]
    %v1012 = vld [vmem:[#allocation8 + $0x3c] sm:$0xf]
    %v1013 = vld [vmem:[#allocation8 + $0x40] sm:$0xf]
    %v1014 = vld [vmem:[#allocation8 + $0x44] sm:$0xf]
    %v1015 = vld [vmem:[#allocation8 + $0x48] sm:$0xf]
    %v1016 = vld [vmem:[#allocation8 + $0x4c] sm:$0xf]
    %v1017 = vld [vmem:[#allocation8 + $0x50] sm:$0xf]
    %v1018 = vld [vmem:[#allocation8 + $0x54] sm:$0xf]
    %v1019 = vld [vmem:[#allocation8 + $0x58] sm:$0xf]
    %v1020 = vld [vmem:[#allocation8 + $0x5c] sm:$0xf]
    %v1021 = vld [vmem:[#allocation8 + $0x60] sm:$0xf]
    %v1022 = vld [vmem:[#allocation8 + $0x64] sm:$0xf]
    %v1023 = vld [vmem:[#allocation8 + $0x68] sm:$0xf]
    %v1024 = vld [vmem:[#allocation8 + $0x6c] sm:$0xf]
    %v1025 = vld [vmem:[#allocation8 + $0x70] sm:$0xf]
    %v1026 = vld [vmem:[#allocation8 + $0x74] sm:$0xf]
    %v1027 = vld [vmem:[#allocation8 + $0x78] sm:$0xf]
    %v1028 = vld [vmem:[#allocation8 + $0x7c] sm:$0xf]
    %v1029 = vld [vmem:[#allocation8 + $0x80] sm:$0xf]
    %v1030 = vld [vmem:[#allocation8 + $0x84] sm:$0xf]
    %v1031 = vld [vmem:[#allocation8 + $0x88] sm:$0xf]
    %v1032 = vld [vmem:[#allocation8 + $0x8c] sm:$0xf]
    %v1033 = vld [vmem:[#allocation8 + $0x90] sm:$0xf]
    %v1034 = vld [vmem:[#allocation8 + $0x94] sm:$0xf]
    %v1035 = vld [vmem:[#allocation8 + $0x98] sm:$0xf]
    %v1036 = vld [vmem:[#allocation8 + $0x9c] sm:$0xf]
    %v1037 = vld [vmem:[#allocation8 + $0xa0] sm:$0xf]
    %v1038 = vld [vmem:[#allocation8 + $0xa4] sm:$0xf]
    %v1039 = vld [vmem:[#allocation8 + $0xa8] sm:$0xf]
    %v1040 = vld [vmem:[#allocation8 + $0xac] sm:$0xf]
    %v1041 = vld [vmem:[#allocation8 + $0xb0] sm:$0xf]
    %v1042 = vld [vmem:[#allocation8 + $0xb4] sm:$0xf]
    %v1043 = vld [vmem:[#allocation8 + $0xb8] sm:$0xf]
    %v1044 = vld [vmem:[#allocation8 + $0xbc] sm:$0xf]
    %v1045 = vld [vmem:[#allocation8 + $0xc0] sm:$0xf]
    %v1046 = vld [vmem:[#allocation8 + $0xc4] sm:$0xf]
    %v1047 = vld [vmem:[#allocation8 + $0xc8] sm:$0xf]
    %v1048 = vld [vmem:[#allocation8 + $0xcc] sm:$0xf]
    %v1049 = vld [vmem:[#allocation8 + $0xd0] sm:$0xf]
    %v1050 = vld [vmem:[#allocation8 + $0xd4] sm:$0xf]
    %v1051 = vld [vmem:[#allocation8 + $0xd8] sm:$0xf]
    %v1052 = vld [vmem:[#allocation8 + $0xdc] sm:$0xf]
    %v1053 = vld [vmem:[#allocation8 + $0xe0] sm:$0xf]
    %v1054 = vld [vmem:[#allocation8 + $0xe4] sm:$0xf]
    %v1055 = vld [vmem:[#allocation8 + $0xe8] sm:$0xf]
    %v1056 = vld [vmem:[#allocation8 + $0xec] sm:$0xf]
    %v1057 = vld [vmem:[#allocation8 + $0xf0] sm:$0xf]
    %v1058 = vld [vmem:[#allocation8 + $0xf4] sm:$0xf]
    %v1059 = vld [vmem:[#allocation8 + $0xf8] sm:$0xf]
    %v1060 = vld [vmem:[#allocation8 + $0xfc] sm:$0xf]
    %v1061 = vld [vmem:[%s6] sm:$0x1]
    %v1063 = vlaneseq
    %v1064 = vshrl.u32 %v1063, 7
    %v1065 = vsub.s32 0, %v1064
    %v1066 = vrot.slane %v1061, %v1065
    %v1132 = vunpack.c.l.b16 %v997
    %v1133 = vunpack.c.l.b16 %v998
    %v1134 = vunpack.c.l.b16 %v999
    %v1135 = vunpack.c.l.b16 %v1000
    %v1136 = vunpack.c.l.b16 %v1001
    %v1137 = vunpack.c.l.b16 %v1002
    %v1138 = vunpack.c.l.b16 %v1003
    %v1139 = vunpack.c.l.b16 %v1004
    %v1140 = vunpack.c.l.b16 %v1005
    %v1141 = vunpack.c.l.b16 %v1006
    %v1142 = vunpack.c.l.b16 %v1007
    %v1143 = vunpack.c.l.b16 %v1008
    %v1144 = vunpack.c.l.b16 %v1009
    %v1145 = vunpack.c.l.b16 %v1010
    %v1146 = vunpack.c.l.b16 %v1011
    %v1147 = vunpack.c.l.b16 %v1012
    %v1148 = vunpack.c.l.b16 %v1013
    %v1149 = vunpack.c.l.b16 %v1014
    %v1150 = vunpack.c.l.b16 %v1015
    %v1151 = vunpack.c.l.b16 %v1016
    %v1152 = vunpack.c.l.b16 %v1017
    %v1153 = vunpack.c.l.b16 %v1018
    %v1154 = vunpack.c.l.b16 %v1019
    %v1155 = vunpack.c.l.b16 %v1020
    %v1156 = vunpack.c.l.b16 %v1021
    %v1157 = vunpack.c.l.b16 %v1022
    %v1158 = vunpack.c.l.b16 %v1023
    %v1159 = vunpack.c.l.b16 %v1024
    %v1160 = vunpack.c.l.b16 %v1025
    %v1161 = vunpack.c.l.b16 %v1026
    %v1162 = vunpack.c.l.b16 %v1027
    %v1163 = vunpack.c.l.b16 %v1028
    %v1164 = vunpack.c.l.b16 %v1029
    %v1165 = vunpack.c.l.b16 %v1030
    %v1166 = vunpack.c.l.b16 %v1031
    %v1167 = vunpack.c.l.b16 %v1032
    %v1168 = vunpack.c.l.b16 %v1033
    %v1169 = vunpack.c.l.b16 %v1034
    %v1170 = vunpack.c.l.b16 %v1035
    %v1171 = vunpack.c.l.b16 %v1036
    %v1172 = vunpack.c.l.b16 %v1037
    %v1173 = vunpack.c.l.b16 %v1038
    %v1174 = vunpack.c.l.b16 %v1039
    %v1175 = vunpack.c.l.b16 %v1040
    %v1176 = vunpack.c.l.b16 %v1041
    %v1177 = vunpack.c.l.b16 %v1042
    %v1178 = vunpack.c.l.b16 %v1043
    %v1179 = vunpack.c.l.b16 %v1044
    %v1180 = vunpack.c.l.b16 %v1045
    %v1181 = vunpack.c.l.b16 %v1046
    %v1182 = vunpack.c.l.b16 %v1047
    %v1183 = vunpack.c.l.b16 %v1048
    %v1184 = vunpack.c.l.b16 %v1049
    %v1185 = vunpack.c.l.b16 %v1050
    %v1186 = vunpack.c.l.b16 %v1051
    %v1187 = vunpack.c.l.b16 %v1052
    %v1188 = vunpack.c.l.b16 %v1053
    %v1189 = vunpack.c.l.b16 %v1054
    %v1190 = vunpack.c.l.b16 %v1055
    %v1191 = vunpack.c.l.b16 %v1056
    %v1192 = vunpack.c.l.b16 %v1057
    %v1193 = vunpack.c.l.b16 %v1058
    %v1194 = vunpack.c.l.b16 %v1059
    %v1195 = vunpack.c.l.b16 %v1060
    %v1196 = vpack.c.b16 %v1133, %v1132
    %v1197 = vpack.c.b16 %v1135, %v1134
    %v1198 = vpack.c.b16 %v1137, %v1136
    %v1199 = vpack.c.b16 %v1139, %v1138
    %v1200 = vpack.c.b16 %v1141, %v1140
    %v1201 = vpack.c.b16 %v1143, %v1142
    %v1202 = vpack.c.b16 %v1145, %v1144
    %v1203 = vpack.c.b16 %v1147, %v1146
    %v1204 = vpack.c.b16 %v1149, %v1148
    %v1205 = vpack.c.b16 %v1151, %v1150
    %v1206 = vpack.c.b16 %v1153, %v1152
    %v1207 = vpack.c.b16 %v1155, %v1154
    %v1208 = vpack.c.b16 %v1157, %v1156
    %v1209 = vpack.c.b16 %v1159, %v1158
    %v1210 = vpack.c.b16 %v1161, %v1160
    %v1211 = vpack.c.b16 %v1163, %v1162
    %v1212 = vpack.c.b16 %v1165, %v1164
    %v1213 = vpack.c.b16 %v1167, %v1166
    %v1214 = vpack.c.b16 %v1169, %v1168
    %v1215 = vpack.c.b16 %v1171, %v1170
    %v1216 = vpack.c.b16 %v1173, %v1172
    %v1217 = vpack.c.b16 %v1175, %v1174
    %v1218 = vpack.c.b16 %v1177, %v1176
    %v1219 = vpack.c.b16 %v1179, %v1178
    %v1220 = vpack.c.b16 %v1181, %v1180
    %v1221 = vpack.c.b16 %v1183, %v1182
    %v1222 = vpack.c.b16 %v1185, %v1184
    %v1223 = vpack.c.b16 %v1187, %v1186
    %v1224 = vpack.c.b16 %v1189, %v1188
    %v1225 = vpack.c.b16 %v1191, %v1190
    %v1226 = vpack.c.b16 %v1193, %v1192
    %v1227 = vpack.c.b16 %v1195, %v1194
    %1260 = vmatprep.subr.bf16.mxu0 0
    %1261 = vmatpush1.bf16.msra.mxu0 %v1203
    %1262 = vmatprep.subr.bf16.mxu0 0
    %1263 = vmatpush1.bf16.msra.mxu0 %v1202
    %1264 = vmatprep.subr.bf16.mxu0 0
    %1265 = vmatpush1.bf16.msra.mxu0 %v1201
    %1266 = vmatprep.subr.bf16.mxu0 0
    %1267 = vmatpush1.bf16.msra.mxu0 %v1200
    %1268 = vmatprep.subr.bf16.mxu0 0
    %1269 = vmatpush1.bf16.msra.mxu0 %v1199
    %1270 = vmatprep.subr.bf16.mxu0 0
    %1271 = vmatpush1.bf16.msra.mxu0 %v1198
    %1272 = vmatprep.subr.bf16.mxu0 0
    %1273 = vmatpush1.bf16.msra.mxu0 %v1197
    %1274 = vmatprep.subr.bf16.mxu0 0
    %1275 = vmatpush1.bf16.msra.mxu0 %v1196
    %1276 = vmatprep.subr.bf16.mxu0 0
    %1277 = vmatpush2.bf16.msra.mxu0 %v1211
    %1278 = vmatprep.subr.bf16.mxu0 0
    %1279 = vmatpush2.bf16.msra.mxu0 %v1210
    %1280 = vmatprep.subr.bf16.mxu0 0
    %1281 = vmatpush2.bf16.msra.mxu0 %v1209
    %1282 = vmatprep.subr.bf16.mxu0 0
    %1283 = vmatpush2.bf16.msra.mxu0 %v1208
    %1284 = vmatprep.subr.bf16.mxu0 0
    %1285 = vmatpush2.bf16.msra.mxu0 %v1207
    %1286 = vmatprep.subr.bf16.mxu0 0
    %1287 = vmatpush2.bf16.msra.mxu0 %v1206
    %1288 = vmatprep.subr.bf16.mxu0 0
    %1289 = vmatpush2.bf16.msra.mxu0 %v1205
    %1290 = vmatprep.subr.bf16.mxu0 0
    %1291 = vmatpush2.bf16.msra.mxu0 %v1204
    %1292 = vmatprep.mubr.bf16.mxu0 %v994
    %1293 = vmatmul.mubr.bf16.gmra.mxu0 %v993
    %v1294 = vpop.f32.mrf.mxu0
    %v1295 = vadd.f32 %v1066, %v1294
    %v1296 = vpop.f32.mrf.mxu0
    %v1297 = vpop.f32.mrf.mxu0
    %v1298 = vpop.f32.mrf.mxu0
    %1299 = vdwg.mxu0
    %1300 = vmatprep.subr.bf16.mxu0 0
    %1301 = vmatpush1.bf16.msra.mxu0 %v1219
    %1302 = vmatprep.subr.bf16.mxu0 0
    %1303 = vmatpush1.bf16.msra.mxu0 %v1218
    %1304 = vmatprep.subr.bf16.mxu0 0
    %1305 = vmatpush1.bf16.msra.mxu0 %v1217
    %1306 = vmatprep.subr.bf16.mxu0 0
    %1307 = vmatpush1.bf16.msra.mxu0 %v1216
    %1308 = vmatprep.subr.bf16.mxu0 0
    %1309 = vmatpush1.bf16.msra.mxu0 %v1215
    %1310 = vmatprep.subr.bf16.mxu0 0
    %1311 = vmatpush1.bf16.msra.mxu0 %v1214
    %1312 = vmatprep.subr.bf16.mxu0 0
    %1313 = vmatpush1.bf16.msra.mxu0 %v1213
    %1314 = vmatprep.subr.bf16.mxu0 0
    %1315 = vmatpush1.bf16.msra.mxu0 %v1212
    %1316 = vmatprep.subr.bf16.mxu0 0
    %1317 = vmatpush2.bf16.msra.mxu0 %v1227
    %1318 = vmatprep.subr.bf16.mxu0 0
    %1319 = vmatpush2.bf16.msra.mxu0 %v1226
    %1320 = vmatprep.subr.bf16.mxu0 0
    %1321 = vmatpush2.bf16.msra.mxu0 %v1225
    %1322 = vmatprep.subr.bf16.mxu0 0
    %1323 = vmatpush2.bf16.msra.mxu0 %v1224
    %1324 = vmatprep.subr.bf16.mxu0 0
    %1325 = vmatpush2.bf16.msra.mxu0 %v1223
    %1326 = vmatprep.subr.bf16.mxu0 0
    %1327 = vmatpush2.bf16.msra.mxu0 %v1222
    %1328 = vmatprep.subr.bf16.mxu0 0
    %1329 = vmatpush2.bf16.msra.mxu0 %v1221
    %1330 = vmatprep.subr.bf16.mxu0 0
    %1331 = vmatpush2.bf16.msra.mxu0 %v1220
    %1332 = vmatprep.mubr.bf16.mxu0 %v996
    %1333 = vmatmul.mubr.bf16.gmra.mxu0 %v995
    %v1334 = vpop.f32.mrf.mxu0
    %v1335 = vadd.f32 %v1295, %v1334
    %v1336 = vpop.f32.mrf.mxu0
    %v1337 = vpop.f32.mrf.mxu0
    %v1338 = vpop.f32.mrf.mxu0
    %1339 = vdwg.mxu0
    %v1340 = vmax.f32 %v1335, 0.0
    %v1341 = vpack.c.bf16 %v1340, %v1340
    %v1342 = vld [vmem:[#allocation10] sm:$0xf]
    %v1343 = vld [vmem:[#allocation10 + $0x4] sm:$0xf]
    %v1344 = vld [vmem:[#allocation10 + $0x8] sm:$0xf]
    %v1345 = vld [vmem:[#allocation10 + $0xc] sm:$0xf]
    %v1346 = vld [vmem:[#allocation10 + $0x10] sm:$0xf]
    %v1347 = vld [vmem:[#allocation10 + $0x14] sm:$0xf]
    %v1348 = vld [vmem:[#allocation10 + $0x18] sm:$0xf]
    %v1349 = vld [vmem:[#allocation10 + $0x1c] sm:$0xf]
    %v1350 = vld [vmem:[#allocation10 + $0x20] sm:$0xf]
    %v1351 = vld [vmem:[#allocation10 + $0x24] sm:$0xf]
    %v1352 = vld [vmem:[#allocation10 + $0x28] sm:$0xf]
    %v1353 = vld [vmem:[#allocation10 + $0x2c] sm:$0xf]
    %v1354 = vld [vmem:[#allocation10 + $0x30] sm:$0xf]
    %v1355 = vld [vmem:[#allocation10 + $0x34] sm:$0xf]
    %v1356 = vld [vmem:[#allocation10 + $0x38] sm:$0xf]
    %v1357 = vld [vmem:[#allocation10 + $0x3c] sm:$0xf]
    %v1358 = vld [vmem:[%s8] sm:$0x1]
    %v1360 = vlaneseq
    %v1361 = vshrl.u32 %v1360, 7
    %v1362 = vsub.s32 0, %v1361
    %v1363 = vrot.slane %v1358, %v1362
    %v1381 = vunpack.c.l.b16 %v1342
    %v1382 = vunpack.c.l.b16 %v1343
    %v1383 = vunpack.c.l.b16 %v1344
    %v1384 = vunpack.c.l.b16 %v1345
    %v1385 = vunpack.c.l.b16 %v1346
    %v1386 = vunpack.c.l.b16 %v1347
    %v1387 = vunpack.c.l.b16 %v1348
    %v1388 = vunpack.c.l.b16 %v1349
    %v1389 = vunpack.c.l.b16 %v1350
    %v1390 = vunpack.c.l.b16 %v1351
    %v1391 = vunpack.c.l.b16 %v1352
    %v1392 = vunpack.c.l.b16 %v1353
    %v1393 = vunpack.c.l.b16 %v1354
    %v1394 = vunpack.c.l.b16 %v1355
    %v1395 = vunpack.c.l.b16 %v1356
    %v1396 = vunpack.c.l.b16 %v1357
    %v1397 = vpack.c.b16 %v1382, %v1381
    %v1398 = vpack.c.b16 %v1384, %v1383
    %v1399 = vpack.c.b16 %v1386, %v1385
    %v1400 = vpack.c.b16 %v1388, %v1387
    %v1401 = vpack.c.b16 %v1390, %v1389
    %v1402 = vpack.c.b16 %v1392, %v1391
    %v1403 = vpack.c.b16 %v1394, %v1393
    %v1404 = vpack.c.b16 %v1396, %v1395
    %1413 = vmatprep.subr.bf16.mxu0 0
    %1414 = vmatpush1.bf16.msra.mxu0 %v1404
    %1415 = vmatprep.subr.bf16.mxu0 0
    %1416 = vmatpush1.bf16.msra.mxu0 %v1403
    %1417 = vmatprep.subr.bf16.mxu0 0
    %1418 = vmatpush1.bf16.msra.mxu0 %v1402
    %1419 = vmatprep.subr.bf16.mxu0 0
    %1420 = vmatpush1.bf16.msra.mxu0 %v1401
    %1421 = vmatprep.subr.bf16.mxu0 0
    %1422 = vmatpush1.bf16.msra.mxu0 %v1400
    %1423 = vmatprep.subr.bf16.mxu0 0
    %1424 = vmatpush1.bf16.msra.mxu0 %v1399
    %1425 = vmatprep.subr.bf16.mxu0 0
    %1426 = vmatpush1.bf16.msra.mxu0 %v1398
    %1427 = vmatprep.subr.bf16.mxu0 0
    %1428 = vmatpush1.bf16.msra.mxu0 %v1397
    %1429 = vmatprep.subr.bf16.mxu0 0
    %1430 = vmatpush2.bf16.msra.mxu0 0
    %1431 = vmatprep.subr.bf16.mxu0 0
    %1432 = vmatpush2.bf16.msra.mxu0 0
    %1433 = vmatprep.subr.bf16.mxu0 0
    %1434 = vmatpush2.bf16.msra.mxu0 0
    %1435 = vmatprep.subr.bf16.mxu0 0
    %1436 = vmatpush2.bf16.msra.mxu0 0
    %1437 = vmatprep.subr.bf16.mxu0 0
    %1438 = vmatpush2.bf16.msra.mxu0 0
    %1439 = vmatprep.subr.bf16.mxu0 0
    %1440 = vmatpush2.bf16.msra.mxu0 0
    %1441 = vmatprep.subr.bf16.mxu0 0
    %1442 = vmatpush2.bf16.msra.mxu0 0
    %1443 = vmatprep.subr.bf16.mxu0 0
    %1444 = vmatpush2.bf16.msra.mxu0 0
    %1445 = vmatprep.mubr.bf16.mxu0 0
    %1446 = vmatmul.mubr.bf16.gmra.mxu0 %v1341
    %v1447 = vpop.f32.mrf.mxu0
    %v1448 = vadd.f32 %v1363, %v1447
    %v1449 = vpop.f32.mrf.mxu0
    %v1450 = vpop.f32.mrf.mxu0
    %v1451 = vpop.f32.mrf.mxu0
    %1452 = vdwg.mxu0
    %1453 = vst [vmem:[#allocation11] sm:$0xff] %v1448
    // Predicated region
    $region58: #{tpu_custom_call.1} parent=1 // pred_check
      _
    $region59: #{tpu_custom_call.1} parent=1 // pred_check_branch
      %1455 = sbr.rel (0) target = $region61
    $region60: #{tpu_custom_call.1} parent=1 // pred_region
      %s1457 = ssub.s32 128, 128
      %1458 = vsyncadd [#allocation4], %s1457
      %s1460 = sshll.u32 [#allocation11], 4
      %s1461 = int_to_ptr.vmem [resolvable:$true] %s1460
      %1463 = dma.vmem_to_hbm [thread:$0]  %s1461, 128, %s9, [#allocation4]
    $region61: #{tpu_custom_call.1} parent=1 // pred_fallthru
      _
    // Predicated region
    $region62: #{tpu_custom_call.1} parent=1 // pred_check
      _
    $region63: #{tpu_custom_call.1} parent=1 // pred_check_branch
      %1465 = sbr.rel (0) target = $region65
    $region64: #{tpu_custom_call.1} parent=1 // pred_region
      %1466 = dma.done [#allocation4], 128
    $region65: #{tpu_custom_call.1} parent=1 // pred_fallthru
      _
    %1467 = vsyncpa [#allocation3], 1
    %1468 = vsyncpa [#allocation6], 1
    %1469 = vsyncpa [#allocation9], 1
    %1470 = vsyncpa [#allocation4], 1

</llo_original>
